<compile_context>
chip_gen: v6e
topology: v6e:2x2x1
jax: 0.10.0
libtpu: 0.0.40
codegen_flags: <defaults>
</compile_context>

<pallas_src>
import functools
from collections import defaultdict

import jax
import jax.numpy as jnp
from jax.experimental import pallas as pl
from jax.experimental.pallas import tpu as pltpu


_LANE_TILE = 512          # D-tile granularity (multiple of 256: v6e/v7x MXU K)
_EPS = 1e-18


def _vmem_capacity_bytes():
    """Per-core VMEM capacity; conservative 64 MiB (v7x) if the query fails."""
    try:
        return int(pltpu.get_tpu_info().vmem_capacity_bytes)
    except Exception:
        return 64 << 20


def _sum_all_keep(x):
    """Sum of a 2-D tile, returned as (1, 1) (lane reduce, then sublane)."""
    return jnp.sum(jnp.sum(x, axis=1, keepdims=True), axis=0, keepdims=True)


def _plan_tiles(n, d, itemsize, tile_budget):
    """(tile_d, num_tiles): whole-D single block when it fits the budget,
    otherwise 512-aligned tiles (multiple of 128 -> valid BlockSpec dim)."""
    if n * d * itemsize <= tile_budget:
        return d, 1
    td = max(_LANE_TILE,
             (tile_budget // (n * itemsize)) // _LANE_TILE * _LANE_TILE)
    return td, pl.cdiv(d, td)


def _dc_group_kernel(fx_ref, fy_ref, loss_ref, gx_ref, gy_ref, *,
                     n, kx, ky, kmax, tdx, tdy, dx, dy):
    """Fused Loss_DC for one (stacked) group of feature pairs.

    Grid = (P pairs [parallel], kmax D-tiles [arbitrary]).
    fx_ref: (1, N, TDx), fy_ref: (1, N, TDy), loss_ref: (1, 1, 1),
    gx_ref / gy_ref: (N, N) f32 Gram accumulators (VMEM scratch)."""
    k = pl.program_id(1)

    @pl.when(k == 0)
    def _init():
        gx_ref[...] = jnp.zeros_like(gx_ref)
        gy_ref[...] = jnp.zeros_like(gy_ref)

    # Contraction on the last dim of BOTH operands: MXU-native transposed-RHS
    # form; avoids materializing fx.T / fy.T (XLU transpose + VMEM copy).
    dn = (((1,), (1,)), ((), ()))

    def _gram_update(f_ref, g_ref, ktiles, td, d):
        f = f_ref[0]                                  # (n, td) tile
        rem = d - (ktiles - 1) * td                   # static tail width
        if rem != td:
            # Ragged last tile: mask out-of-bounds lanes in-kernel instead of
            # padding in the wrapper (saves a full HBM round-trip of features).
            lane = jax.lax.broadcasted_iota(jnp.int32, (n, td), 1)
            valid = jnp.where(k == ktiles - 1, rem, td)
            f = jnp.where(lane < valid, f, jnp.zeros_like(f))
        g_ref[...] += jax.lax.dot_general(
            f, f, dimension_numbers=dn, preferred_element_type=jnp.float32)

    if kx == kmax and ky == kmax:
        # Common case: straight-line hot loop, no scf.if around the MXU pushes.
        _gram_update(fx_ref, gx_ref, kx, tdx, dx)
        _gram_update(fy_ref, gy_ref, ky, tdy, dy)
    else:
        @pl.when(k < kx)
        def _acc_x():
            _gram_update(fx_ref, gx_ref, kx, tdx, dx)

        @pl.when(k < ky)
        def _acc_y():
            _gram_update(fy_ref, gy_ref, ky, tdy, dy)

    @pl.when(k == kmax - 1)
    def _epilogue():
        rows = jax.lax.broadcasted_iota(jnp.int32, (n, n), 0)
        cols = jax.lax.broadcasted_iota(jnp.int32, (n, n), 1)
        diag = rows == cols

        inv_nm2 = jnp.float32(1.0 / (n - 2))
        inv_nm1nm2 = jnp.float32(1.0 / ((n - 1) * (n - 2)))

        def centered(g):
            # ||xi - xj||^2 = g_ii + g_jj - 2 g_ij  (clamped: cancellation)
            gd = jnp.where(diag, g, 0.0)
            g_ii = jnp.sum(gd, axis=1, keepdims=True)      # (n, 1)
            g_jj = jnp.sum(gd, axis=0, keepdims=True)      # (1, n)
            a = jnp.sqrt(jnp.maximum(g_ii + g_jj - 2.0 * g, 0.0) + _EPS)
            # Reference quirk: 'aa' and 'ab' are the same row-sum; both are
            # subtracted.  Reproduce exactly.
            aa = jnp.sum(a, axis=0, keepdims=True) * inv_nm2
            ac = jnp.sum(a) * inv_nm1nm2
            return jnp.where(diag, 0.0, a - aa - aa + ac)   # zero diagonal

        # Center IN PLACE: bounds the live ranges of the (n, n) temporaries.
        gx_ref[...] = centered(gx_ref[...])
        gy_ref[...] = centered(gy_ref[...])

        inv_br = jnp.float32(1.0 / (n * (n - 3)))
        A = gx_ref[...]
        B = gy_ref[...]
        gxy = _sum_all_keep(A * B) * inv_br                 # (1, 1)
        gxx = _sum_all_keep(A * A) * inv_br
        gyy = _sum_all_keep(B * B) * inv_br
        corr = gxy / jnp.sqrt(gxx * gyy + _EPS)
        loss_ref[...] = jnp.reshape(-corr, (1, 1, 1))


def _in_spec(block_shape, index_map, nbuf):
    """Input BlockSpec; request 3-deep pipelining when asked (v7x headroom)."""
    if nbuf > 2:
        try:
            return pl.BlockSpec(block_shape, index_map,
                                pipeline_mode=pl.Buffered(nbuf))
        except TypeError:
            pass
    return pl.BlockSpec(block_shape, index_map)


def _dc_group_loss(fx3, fy3):
    """Sum over P of -Correlation(pdist(fx3[p]), pdist(fy3[p])), one kernel."""
    p, n, dx = fx3.shape
    _, ny, dy = fy3.shape
    assert ny == n, "student/teacher batch dims must match"
    assert n > 3, "Loss_DC requires batch size n > 3 (same as the reference)"

    ex = jnp.dtype(fx3.dtype).itemsize
    ey = jnp.dtype(fy3.dtype).itemsize

    cap = _vmem_capacity_bytes()
    small_vmem = cap <= (64 << 20)                  # v7x: 64 MiB per TensorCore
    hard_cap = min(cap, 100 << 20) - (4 << 20)      # compiler-scratch headroom

    # Resident (n, n) f32 Gram scratch + in-place epilogue temporaries.
    gram_epi = 6 * n * n * 4 + (2 << 20)
    if gram_epi > hard_cap:
        # TODO(synk): N-tiled Gram/epilogue path for very large batch sizes.
        raise NotImplementedError(
            f"Loss_DC Pallas kernel: batch n={n} needs ~{gram_epi >> 20} MiB of "
            f"VMEM for resident Gram matrices; only ~{hard_cap >> 20} MiB usable "
            "on this TPU generation.")

    # Generation-aware input-tile budget: fat tiles on 128 MiB parts (v5e/v6e),
    # modest tiles + deeper pipelining on 64 MiB parts (v7x).
    bufs_plan = 3 if small_vmem else 2
    per_input = (hard_cap - gram_epi) // (2 * bufs_plan)
    tile_cap = (4 << 20) if small_vmem else (16 << 20)
    tile_budget = min(per_input, tile_cap)

    tdx, kx = _plan_tiles(n, dx, ex, tile_budget)
    tdy, ky = _plan_tiles(n, dy, ey, tile_budget)
    kmax = max(kx, ky)

    bufs_x = 3 if (small_vmem and kx > 2) else 2
    bufs_y = 3 if (small_vmem and ky > 2) else 2

    vmem_need = gram_epi + bufs_x * n * tdx * ex + bufs_y * n * tdy * ey
    if vmem_need > hard_cap:
        # TODO(synk): fall back to an N-tiled Gram plan instead of raising.
        raise NotImplementedError(
            f"Loss_DC Pallas kernel: VMEM need ~{vmem_need >> 20} MiB exceeds "
            f"the ~{hard_cap >> 20} MiB usable on this TPU generation "
            f"(n={n}, d=({dx},{dy})).")
    vmem_limit = int(min(max(vmem_need, 32 << 20), hard_cap))

    def _index_map(ktiles):
        if ktiles == kmax:
            return lambda pi, k: (pi, 0, k)
        last = ktiles - 1
        # Fewer D tiles for this input: clamp the block index; the pl.when
        # guard in the kernel skips the extra accumulation.
        return lambda pi, k: (pi, 0, jnp.minimum(k, last))

    kernel = functools.partial(
        _dc_group_kernel, n=n, kx=kx, ky=ky, kmax=kmax,
        tdx=tdx, tdy=tdy, dx=dx, dy=dy)

    out = pl.pallas_call(
        kernel,
        out_shape=jax.ShapeDtypeStruct((p, 1, 1), jnp.float32),
        grid_spec=pltpu.PrefetchScalarGridSpec(
            num_scalar_prefetch=0,
            grid=(p, kmax),
            in_specs=[_in_spec((1, n, tdx), _index_map(kx), bufs_x),
                      _in_spec((1, n, tdy), _index_map(ky), bufs_y)],
            out_specs=pl.BlockSpec((1, 1, 1), lambda pi, k: (pi, 0, 0)),
            scratch_shapes=[pltpu.VMEM((n, n), jnp.float32),
                            pltpu.VMEM((n, n), jnp.float32)],
        ),
        compiler_params=pltpu.CompilerParams(
            dimension_semantics=("parallel", "arbitrary"),
            vmem_limit_bytes=vmem_limit),
    )(fx3, fy3)
    return jnp.sum(out)


def loss_dc(featuresX, featuresY):
    """JAX/Pallas equivalent of Loss_DC.forward."""
    if not isinstance(featuresX, (list, tuple)):
        featuresX = [featuresX]
    if not isinstance(featuresY, (list, tuple)):
        featuresY = [featuresY]

    flat = []
    for f_x, f_y in zip(featuresX, featuresY):
        flat.append((f_x.reshape(f_x.shape[0], -1),
                     f_y.reshape(f_y.shape[0], -1)))

    # Group same-shaped pairs onto a leading 'parallel' grid axis: shards
    # across the two TensorCores on v7x and amortizes launch overhead.
    groups = defaultdict(list)
    for i, (fx, fy) in enumerate(flat):
        groups[(fx.shape, fx.dtype, fy.shape, fy.dtype)].append(i)

    dc_loss = jnp.float32(0.0)
    for _, idxs in groups.items():
        if len(idxs) == 1:
            fx3 = flat[idxs[0]][0][None]          # free expand_dims, no copy
            fy3 = flat[idxs[0]][1][None]
        else:
            # NOTE: one HBM copy to stack, traded for single-kernel execution
            # of all same-shaped layer pairs.
            fx3 = jnp.stack([flat[i][0] for i in idxs])
            fy3 = jnp.stack([flat[i][1] for i in idxs])
        dc_loss = dc_loss + _dc_group_loss(fx3, fy3)
    return dc_loss


# ------------------------- pure-JAX reference ------------------------------
def _p_distance_matrix_ref(latent):
    n = latent.shape[0]
    diff = latent[None, :, :] - latent[:, None, :]
    matrix_a = jnp.sqrt(jnp.sum(jnp.square(diff), axis=-1) + 1e-18)
    aa = jnp.sum(matrix_a, axis=0, keepdims=True) / (n - 2)
    ac = jnp.sum(matrix_a) / ((n - 1) * (n - 2))
    matrix_A = matrix_a - aa - aa + ac
    matrix_A = matrix_A - jnp.diag(jnp.diag(matrix_A))
    return matrix_A


def _loss_dc_ref(fx, fy):
    fx = fx.reshape(fx.shape[0], -1)
    fy = fy.reshape(fy.shape[0], -1)
    A = _p_distance_matrix_ref(fx)
    B = _p_distance_matrix_ref(fy)
    n = A.shape[0]
    br = lambda M, N_: jnp.sum(M * N_) / (n * (n - 3))
    return -(br(A, B) / jnp.sqrt(br(A, A) * br(B, B) + 1e-18))


if __name__ == "__main__":
    key = jax.random.PRNGKey(0)
    k0, k1 = jax.random.split(key)
    # NCHW inputs, as the PyTorch module would receive from a conv backbone.
    x = jax.random.normal(k0, (8, 4, 16, 16), dtype=jnp.float32)
    y = jax.random.normal(k1, (8, 4, 16, 16), dtype=jnp.float32)

    loss = jax.block_until_ready(loss_dc(x, y))
    ref = jax.block_until_ready(_loss_dc_ref(x, y))
    assert jnp.allclose(loss, ref, rtol=1e-3, atol=1e-3), (loss, ref)

    print("KERNEL_OK")
</pallas_src>

<mosaic_0001>
module attributes {stable_mosaic.version = 11 : i64} {
  func.func @_dc_group_kernel(%arg0: i32, %arg1: i32, %arg2: memref<1x8x1024xf32, #tpu.memory_space<vmem>>, %arg3: memref<1x8x1024xf32, #tpu.memory_space<vmem>>, %arg4: memref<1x1x1xf32, #tpu.memory_space<vmem>>, %arg5: memref<8x8xf32, #tpu.memory_space<vmem>>, %arg6: memref<8x8xf32, #tpu.memory_space<vmem>>) attributes {dimension_semantics = [#tpu.dimension_semantics<parallel>, #tpu.dimension_semantics<arbitrary>], iteration_bounds = array<i64: 1, 1>, scalar_prefetch = 0 : i64, scratch_operands = 2 : i64, tpu.core_type = #tpu.core_type<tc>, window_params = [{transform_indices = @transform_0, window_bounds = array<i64: 1, 8, 1024>}, {transform_indices = @transform_1, window_bounds = array<i64: 1, 8, 1024>}, {transform_indices = @transform_2, window_bounds = array<i64: 1, 1, 1>}]} {
    %c0_i32 = arith.constant 0 : i32
    %0 = arith.cmpi eq, %arg1, %c0_i32 : i32
    %1 = arith.extui %0 : i1 to i32
    %c0_i32_0 = arith.constant 0 : i32
    %2 = arith.cmpi ne, %1, %c0_i32_0 : i32
    scf.if %2 {
      %cst_17 = arith.constant 0.000000e+00 : f32
      %18 = vector.broadcast %cst_17 : f32 to vector<8x8xf32>
      %c0_18 = arith.constant 0 : index
      %c0_19 = arith.constant 0 : index
      %19 = vector.load %arg5[%c0_18, %c0_19] : memref<8x8xf32, #tpu.memory_space<vmem>>, vector<8x8xf32>
      tpu.vector_store %arg5[%c0_18, %c0_19], %18 {strides = array<i32>} : memref<8x8xf32, #tpu.memory_space<vmem>>, vector<8x8xf32>,
      %cst_20 = arith.constant 0.000000e+00 : f32
      %20 = vector.broadcast %cst_20 : f32 to vector<8x8xf32>
      %c0_21 = arith.constant 0 : index
      %c0_22 = arith.constant 0 : index
      %21 = vector.load %arg6[%c0_21, %c0_22] : memref<8x8xf32, #tpu.memory_space<vmem>>, vector<8x8xf32>
      tpu.vector_store %arg6[%c0_21, %c0_22], %20 {strides = array<i32>} : memref<8x8xf32, #tpu.memory_space<vmem>>, vector<8x8xf32>,
    } else {
    }
    %c0 = arith.constant 0 : index
    %c0_1 = arith.constant 0 : index
    %c0_2 = arith.constant 0 : index
    %3 = vector.load %arg2[%c0, %c0_1, %c0_2] : memref<1x8x1024xf32, #tpu.memory_space<vmem>>, vector<1x8x1024xf32>
    %4 = vector.shape_cast %3 : vector<1x8x1024xf32> to vector<8x1024xf32>
    %c0_3 = arith.constant 0 : index
    %c0_4 = arith.constant 0 : index
    %5 = vector.load %arg5[%c0_3, %c0_4] : memref<8x8xf32, #tpu.memory_space<vmem>>, vector<8x8xf32>
    %cst = arith.constant dense<0.000000e+00> : vector<8x8xf32>
    %6 = tpu.matmul %4, %4, %cst {dimension_numbers = #tpu.dot_dimension_numbers<[1], [1], [0], [0], [0, 0, 1, 0], [], []>} : vector<8x1024xf32>, vector<8x1024xf32>, vector<8x8xf32> -> vector<8x8xf32>
    %7 = arith.addf %5, %6 : vector<8x8xf32>
    %c0_5 = arith.constant 0 : index
    %c0_6 = arith.constant 0 : index
    %8 = vector.load %arg5[%c0_5, %c0_6] : memref<8x8xf32, #tpu.memory_space<vmem>>, vector<8x8xf32>
    tpu.vector_store %arg5[%c0_5, %c0_6], %7 {strides = array<i32>} : memref<8x8xf32, #tpu.memory_space<vmem>>, vector<8x8xf32>,
    %c0_7 = arith.constant 0 : index
    %c0_8 = arith.constant 0 : index
    %c0_9 = arith.constant 0 : index
    %9 = vector.load %arg3[%c0_7, %c0_8, %c0_9] : memref<1x8x1024xf32, #tpu.memory_space<vmem>>, vector<1x8x1024xf32>
    %10 = vector.shape_cast %9 : vector<1x8x1024xf32> to vector<8x1024xf32>
    %c0_10 = arith.constant 0 : index
    %c0_11 = arith.constant 0 : index
    %11 = vector.load %arg6[%c0_10, %c0_11] : memref<8x8xf32, #tpu.memory_space<vmem>>, vector<8x8xf32>
    %cst_12 = arith.constant dense<0.000000e+00> : vector<8x8xf32>
    %12 = tpu.matmul %10, %10, %cst_12 {dimension_numbers = #tpu.dot_dimension_numbers<[1], [1], [0], [0], [0, 0, 1, 0], [], []>} : vector<8x1024xf32>, vector<8x1024xf32>, vector<8x8xf32> -> vector<8x8xf32>
    %13 = arith.addf %11, %12 : vector<8x8xf32>
    %c0_13 = arith.constant 0 : index
    %c0_14 = arith.constant 0 : index
    %14 = vector.load %arg6[%c0_13, %c0_14] : memref<8x8xf32, #tpu.memory_space<vmem>>, vector<8x8xf32>
    tpu.vector_store %arg6[%c0_13, %c0_14], %13 {strides = array<i32>} : memref<8x8xf32, #tpu.memory_space<vmem>>, vector<8x8xf32>,
    %c0_i32_15 = arith.constant 0 : i32
    %15 = arith.cmpi eq, %arg1, %c0_i32_15 : i32
    %16 = arith.extui %15 : i1 to i32
    %c0_i32_16 = arith.constant 0 : i32
    %17 = arith.cmpi ne, %16, %c0_i32_16 : i32
    scf.if %17 {
      %18 = tpu.iota {dimensions = array<i32: 0>} : vector<8x8xi32>
      %19 = tpu.iota {dimensions = array<i32: 1>} : vector<8x8xi32>
      %20 = arith.cmpi eq, %18, %19 : vector<8x8xi32>
      %c0_17 = arith.constant 0 : index
      %c0_18 = arith.constant 0 : index
      %21 = vector.load %arg5[%c0_17, %c0_18] : memref<8x8xf32, #tpu.memory_space<vmem>>, vector<8x8xf32>
      %cst_19 = arith.constant 0.000000e+00 : f32
      %22 = vector.broadcast %cst_19 : f32 to vector<8x8xf32>
      %23 = arith.select %20, %21, %22 : vector<8x8xi1>, vector<8x8xf32>
      %cst_20 = arith.constant dense<0.000000e+00> : vector<8xf32>
      %24 = vector.multi_reduction <add>, %23, %cst_20 [1] : vector<8x8xf32> to vector<8xf32>
      %25 = vector.shape_cast %24 : vector<8xf32> to vector<8x1xf32>
      %cst_21 = arith.constant dense<0.000000e+00> : vector<8xf32>
      %26 = vector.multi_reduction <add>, %23, %cst_21 [0] : vector<8x8xf32> to vector<8xf32>
      %27 = vector.shape_cast %26 : vector<8xf32> to vector<1x8xf32>
      %28 = vector.broadcast %25 : vector<8x1xf32> to vector<8x8xf32>
      %29 = vector.broadcast %27 : vector<1x8xf32> to vector<8x8xf32>
      %30 = arith.addf %28, %29 : vector<8x8xf32>
      %cst_22 = arith.constant 2.000000e+00 : f32
      %31 = vector.broadcast %cst_22 : f32 to vector<8x8xf32>
      %32 = arith.mulf %31, %21 : vector<8x8xf32>
      %33 = arith.subf %30, %32 : vector<8x8xf32>
      %cst_23 = arith.constant 0.000000e+00 : f32
      %34 = vector.broadcast %cst_23 : f32 to vector<8x8xf32>
      %35 = arith.maximumf %33, %34 : vector<8x8xf32>
      %cst_24 = arith.constant 1.000000e-18 : f32
      %36 = vector.broadcast %cst_24 : f32 to vector<8x8xf32>
      %37 = arith.addf %35, %36 : vector<8x8xf32>
      %38 = math.sqrt %37 : vector<8x8xf32>
      %cst_25 = arith.constant dense<0.000000e+00> : vector<8xf32>
      %39 = vector.multi_reduction <add>, %38, %cst_25 [0] : vector<8x8xf32> to vector<8xf32>
      %40 = vector.shape_cast %39 : vector<8xf32> to vector<1x8xf32>
      %cst_26 = arith.constant 0.166666672 : f32
      %41 = vector.broadcast %cst_26 : f32 to vector<1x8xf32>
      %42 = arith.mulf %40, %41 : vector<1x8xf32>
      %43 = vector.shape_cast %38 : vector<8x8xf32> to vector<1x8x8xf32>
      %cst_27 = arith.constant dense<0.000000e+00> : vector<1xf32>
      %44 = vector.multi_reduction <add>, %43, %cst_27 [1, 2] : vector<1x8x8xf32> to vector<1xf32>
      %45 = vector.shape_cast %44 : vector<1xf32> to vector<1x1x1xf32>
      %46 = vector.extract %45[0, 0, 0] : f32 from vector<1x1x1xf32>
      %cst_28 = arith.constant 0.0238095243 : f32
      %47 = arith.mulf %46, %cst_28 : f32
      %48 = vector.broadcast %42 : vector<1x8xf32> to vector<8x8xf32>
      %49 = arith.subf %38, %48 : vector<8x8xf32>
      %50 = vector.broadcast %42 : vector<1x8xf32> to vector<8x8xf32>
      %51 = arith.subf %49, %50 : vector<8x8xf32>
      %52 = vector.broadcast %47 : f32 to vector<8x8xf32>
      %53 = arith.addf %51, %52 : vector<8x8xf32>
      %cst_29 = arith.constant 0.000000e+00 : f32
      %54 = vector.broadcast %cst_29 : f32 to vector<8x8xf32>
      %55 = arith.select %20, %54, %53 : vector<8x8xi1>, vector<8x8xf32>
      %c0_30 = arith.constant 0 : index
      %c0_31 = arith.constant 0 : index
      %56 = vector.load %arg5[%c0_30, %c0_31] : memref<8x8xf32, #tpu.memory_space<vmem>>, vector<8x8xf32>
      tpu.vector_store %arg5[%c0_30, %c0_31], %55 {strides = array<i32>} : memref<8x8xf32, #tpu.memory_space<vmem>>, vector<8x8xf32>,
      %c0_32 = arith.constant 0 : index
      %c0_33 = arith.constant 0 : index
      %57 = vector.load %arg6[%c0_32, %c0_33] : memref<8x8xf32, #tpu.memory_space<vmem>>, vector<8x8xf32>
      %cst_34 = arith.constant 0.000000e+00 : f32
      %58 = vector.broadcast %cst_34 : f32 to vector<8x8xf32>
      %59 = arith.select %20, %57, %58 : vector<8x8xi1>, vector<8x8xf32>
      %cst_35 = arith.constant dense<0.000000e+00> : vector<8xf32>
      %60 = vector.multi_reduction <add>, %59, %cst_35 [1] : vector<8x8xf32> to vector<8xf32>
      %61 = vector.shape_cast %60 : vector<8xf32> to vector<8x1xf32>
      %cst_36 = arith.constant dense<0.000000e+00> : vector<8xf32>
      %62 = vector.multi_reduction <add>, %59, %cst_36 [0] : vector<8x8xf32> to vector<8xf32>
      %63 = vector.shape_cast %62 : vector<8xf32> to vector<1x8xf32>
      %64 = vector.broadcast %61 : vector<8x1xf32> to vector<8x8xf32>
      %65 = vector.broadcast %63 : vector<1x8xf32> to vector<8x8xf32>
      %66 = arith.addf %64, %65 : vector<8x8xf32>
      %cst_37 = arith.constant 2.000000e+00 : f32
      %67 = vector.broadcast %cst_37 : f32 to vector<8x8xf32>
      %68 = arith.mulf %67, %57 : vector<8x8xf32>
      %69 = arith.subf %66, %68 : vector<8x8xf32>
      %cst_38 = arith.constant 0.000000e+00 : f32
      %70 = vector.broadcast %cst_38 : f32 to vector<8x8xf32>
      %71 = arith.maximumf %69, %70 : vector<8x8xf32>
      %cst_39 = arith.constant 1.000000e-18 : f32
      %72 = vector.broadcast %cst_39 : f32 to vector<8x8xf32>
      %73 = arith.addf %71, %72 : vector<8x8xf32>
      %74 = math.sqrt %73 : vector<8x8xf32>
      %cst_40 = arith.constant dense<0.000000e+00> : vector<8xf32>
      %75 = vector.multi_reduction <add>, %74, %cst_40 [0] : vector<8x8xf32> to vector<8xf32>
      %76 = vector.shape_cast %75 : vector<8xf32> to vector<1x8xf32>
      %cst_41 = arith.constant 0.166666672 : f32
      %77 = vector.broadcast %cst_41 : f32 to vector<1x8xf32>
      %78 = arith.mulf %76, %77 : vector<1x8xf32>
      %79 = vector.shape_cast %74 : vector<8x8xf32> to vector<1x8x8xf32>
      %cst_42 = arith.constant dense<0.000000e+00> : vector<1xf32>
      %80 = vector.multi_reduction <add>, %79, %cst_42 [1, 2] : vector<1x8x8xf32> to vector<1xf32>
      %81 = vector.shape_cast %80 : vector<1xf32> to vector<1x1x1xf32>
      %82 = vector.extract %81[0, 0, 0] : f32 from vector<1x1x1xf32>
      %cst_43 = arith.constant 0.0238095243 : f32
      %83 = arith.mulf %82, %cst_43 : f32
      %84 = vector.broadcast %78 : vector<1x8xf32> to vector<8x8xf32>
      %85 = arith.subf %74, %84 : vector<8x8xf32>
      %86 = vector.broadcast %78 : vector<1x8xf32> to vector<8x8xf32>
      %87 = arith.subf %85, %86 : vector<8x8xf32>
      %88 = vector.broadcast %83 : f32 to vector<8x8xf32>
      %89 = arith.addf %87, %88 : vector<8x8xf32>
      %cst_44 = arith.constant 0.000000e+00 : f32
      %90 = vector.broadcast %cst_44 : f32 to vector<8x8xf32>
      %91 = arith.select %20, %90, %89 : vector<8x8xi1>, vector<8x8xf32>
      %c0_45 = arith.constant 0 : index
      %c0_46 = arith.constant 0 : index
      %92 = vector.load %arg6[%c0_45, %c0_46] : memref<8x8xf32, #tpu.memory_space<vmem>>, vector<8x8xf32>
      tpu.vector_store %arg6[%c0_45, %c0_46], %91 {strides = array<i32>} : memref<8x8xf32, #tpu.memory_space<vmem>>, vector<8x8xf32>,
      %c0_47 = arith.constant 0 : index
      %c0_48 = arith.constant 0 : index
      %93 = vector.load %arg5[%c0_47, %c0_48] : memref<8x8xf32, #tpu.memory_space<vmem>>, vector<8x8xf32>
      %c0_49 = arith.constant 0 : index
      %c0_50 = arith.constant 0 : index
      %94 = vector.load %arg6[%c0_49, %c0_50] : memref<8x8xf32, #tpu.memory_space<vmem>>, vector<8x8xf32>
      %95 = arith.mulf %93, %94 : vector<8x8xf32>
      %cst_51 = arith.constant dense<0.000000e+00> : vector<8xf32>
      %96 = vector.multi_reduction <add>, %95, %cst_51 [1] : vector<8x8xf32> to vector<8xf32>
      %97 = vector.shape_cast %96 : vector<8xf32> to vector<8x1xf32>
      %cst_52 = arith.constant dense<0.000000e+00> : vector<1xf32>
      %98 = vector.multi_reduction <add>, %97, %cst_52 [0] : vector<8x1xf32> to vector<1xf32>
      %99 = vector.shape_cast %98 : vector<1xf32> to vector<1x1xf32>
      %cst_53 = arith.constant 2.500000e-02 : f32
      %100 = vector.broadcast %cst_53 : f32 to vector<1x1xf32>
      %101 = arith.mulf %99, %100 : vector<1x1xf32>
      %102 = arith.mulf %93, %93 : vector<8x8xf32>
      %cst_54 = arith.constant dense<0.000000e+00> : vector<8xf32>
      %103 = vector.multi_reduction <add>, %102, %cst_54 [1] : vector<8x8xf32> to vector<8xf32>
      %104 = vector.shape_cast %103 : vector<8xf32> to vector<8x1xf32>
      %cst_55 = arith.constant dense<0.000000e+00> : vector<1xf32>
      %105 = vector.multi_reduction <add>, %104, %cst_55 [0] : vector<8x1xf32> to vector<1xf32>
      %106 = vector.shape_cast %105 : vector<1xf32> to vector<1x1xf32>
      %cst_56 = arith.constant 2.500000e-02 : f32
      %107 = vector.broadcast %cst_56 : f32 to vector<1x1xf32>
      %108 = arith.mulf %106, %107 : vector<1x1xf32>
      %109 = arith.mulf %94, %94 : vector<8x8xf32>
      %cst_57 = arith.constant dense<0.000000e+00> : vector<8xf32>
      %110 = vector.multi_reduction <add>, %109, %cst_57 [1] : vector<8x8xf32> to vector<8xf32>
      %111 = vector.shape_cast %110 : vector<8xf32> to vector<8x1xf32>
      %cst_58 = arith.constant dense<0.000000e+00> : vector<1xf32>
      %112 = vector.multi_reduction <add>, %111, %cst_58 [0] : vector<8x1xf32> to vector<1xf32>
      %113 = vector.shape_cast %112 : vector<1xf32> to vector<1x1xf32>
      %cst_59 = arith.constant 2.500000e-02 : f32
      %114 = vector.broadcast %cst_59 : f32 to vector<1x1xf32>
      %115 = arith.mulf %113, %114 : vector<1x1xf32>
      %116 = arith.mulf %108, %115 : vector<1x1xf32>
      %cst_60 = arith.constant 1.000000e-18 : f32
      %117 = vector.broadcast %cst_60 : f32 to vector<1x1xf32>
      %118 = arith.addf %116, %117 : vector<1x1xf32>
      %119 = math.sqrt %118 : vector<1x1xf32>
      %120 = arith.divf %101, %119 : vector<1x1xf32>
      %cst_61 = arith.constant 0.000000e+00 : f32
      %121 = vector.broadcast %cst_61 : f32 to vector<1x1xf32>
      %122 = arith.subf %121, %120 : vector<1x1xf32>
      %123 = vector.shape_cast %122 : vector<1x1xf32> to vector<1x1x1xf32>
      %c0_62 = arith.constant 0 : index
      %c0_63 = arith.constant 0 : index
      %c0_64 = arith.constant 0 : index
      %124 = vector.load %arg4[%c0_62, %c0_63, %c0_64] : memref<1x1x1xf32, #tpu.memory_space<vmem>>, vector<1x1x1xf32>
      tpu.vector_store %arg4[%c0_62, %c0_63, %c0_64], %123 {strides = array<i32>} : memref<1x1x1xf32, #tpu.memory_space<vmem>>, vector<1x1x1xf32>,
    } else {
    }
    return
  }
  func.func @transform_0(%arg0: i32, %arg1: i32) -> (i32, i32, i32) {
    %c0_i32 = arith.constant 0 : i32
    %c0_i32_0 = arith.constant 0 : i32
    return %arg0, %c0_i32, %arg1 : i32, i32, i32
  }
  func.func @transform_1(%arg0: i32, %arg1: i32) -> (i32, i32, i32) {
    %c0_i32 = arith.constant 0 : i32
    %c0_i32_0 = arith.constant 0 : i32
    return %arg0, %c0_i32, %arg1 : i32, i32, i32
  }
  func.func @transform_2(%arg0: i32, %arg1: i32) -> (i32, i32, i32) {
    %c0_i32 = arith.constant 0 : i32
    %c0_i32_0 = arith.constant 0 : i32
    %c0_i32_1 = arith.constant 0 : i32
    return %arg0, %c0_i32, %c0_i32_0 : i32, i32, i32
  }
}

</mosaic_0001>

<llo_original>
// kernel: tpu_custom_call.1
$region0: #{tpu_custom_call.1}
  #allocation0 [shape = 'u32[]', space=smem, size = 0x4, offset = 0x4, fixed_abs, tag = 'smem constant byte address 0x4 - core index']
  #allocation1 [shape = 'u32[144,128]{1,0:T(1,128)}', space=vmem, size = 0x12000, scoped, tag = 'internal scratch']
  #allocation2 [shape = 'f32[8,8]{1,0:T(8,128)}', space=vmem, size = 0x1000, scoped, tag = 'scratch operand']
  #allocation3 [shape = 'f32[8,8]{1,0:T(8,128)}', space=vmem, size = 0x1000, scoped, tag = 'scratch operand']
  %s0 = inlined_call_operand.hbm [shape: f32[1,8,1024], index: 0, kind: input, shape index: {}]
  %s1 = inlined_call_operand.hbm [shape: f32[1,8,1024], index: 1, kind: input, shape index: {}]
  %s2 = inlined_call_operand.hbm [shape: f32[1,1,1], index: 2, kind: output, shape index: {}]
  %s3 = sld [smem:[#allocation0]]
  $region34: #{tpu_custom_call.1} parent=0
    _
  %s5 = ssub.s32 1, %s3
  %s6 = scalar_select 0, %s5, %s3
  $region1: #{tpu_custom_call.1} parent=0
    #allocation4 [shape = 'u8[32768]{0}', space=vmem, size = 0x8000, scoped, tag = 'input window, operand 0, single buffered']
    #allocation5 [shape = 's32[1]{0}', space=sflag, size = 0x4, scoped, tag = 'scoped memory for tpu_custom_call.1']
    #allocation6 [shape = 's32[1]{0}', space=sflag, size = 0x4, scoped, tag = 'scoped memory for tpu_custom_call.1']
    #allocation7 [shape = 'u8[32768]{0}', space=vmem, size = 0x8000, scoped, tag = 'input window, operand 1, single buffered']
    #allocation8 [shape = 's32[1]{0}', space=sflag, size = 0x4, scoped, tag = 'scoped memory for tpu_custom_call.1']
    #allocation9 [shape = 'u8[512]{0}', space=vmem, size = 0x400, scoped, tag = 'output window, operand 0, single buffered']
    %7 = vsyncpa [#allocation5], 0
    %8 = vsyncpa [#allocation8], 0
    %9 = vsyncpa [#allocation6], 0
    // Predicated region
    $region2: #{tpu_custom_call.1} parent=1 // pred_check
      _
    $region3: #{tpu_custom_call.1} parent=1 // pred_check_branch
      %11 = sbr.rel (0) target = $region5
    $region4: #{tpu_custom_call.1} parent=1 // pred_region
      %s13 = ssub.s32 1024, 1024
      %14 = vsyncadd [#allocation5], %s13
      %s16 = sshll.u32 [#allocation4], 4
      %s17 = int_to_ptr.vmem [resolvable:$true] %s16
      %19 = dma.hbm_to_vmem [thread:$0]  %s0, 1024, %s17, [#allocation5]
    $region5: #{tpu_custom_call.1} parent=1 // pred_fallthru
      _
    // Predicated region
    $region6: #{tpu_custom_call.1} parent=1 // pred_check
      _
    $region7: #{tpu_custom_call.1} parent=1 // pred_check_branch
      %21 = sbr.rel (0) target = $region9
    $region8: #{tpu_custom_call.1} parent=1 // pred_region
      %s23 = ssub.s32 1024, 1024
      %24 = vsyncadd [#allocation8], %s23
      %s26 = sshll.u32 [#allocation7], 4
      %s27 = int_to_ptr.vmem [resolvable:$true] %s26
      %29 = dma.hbm_to_vmem [thread:$0]  %s1, 1024, %s27, [#allocation8]
    $region9: #{tpu_custom_call.1} parent=1 // pred_fallthru
      _
    // Predicated region
    $region10: #{tpu_custom_call.1} parent=1 // pred_check
      _
    $region11: #{tpu_custom_call.1} parent=1 // pred_check_branch
      %31 = sbr.rel (0) target = $region13
    $region12: #{tpu_custom_call.1} parent=1 // pred_region
      %32 = dma.done [#allocation5], 1024
    $region13: #{tpu_custom_call.1} parent=1 // pred_fallthru
      _
    // Predicated region
    $region14: #{tpu_custom_call.1} parent=1 // pred_check
      _
    $region15: #{tpu_custom_call.1} parent=1 // pred_check_branch
      %34 = sbr.rel (0) target = $region17
    $region16: #{tpu_custom_call.1} parent=1 // pred_region
      %35 = dma.done [#allocation8], 1024
    $region17: #{tpu_custom_call.1} parent=1 // pred_fallthru
      _
    %p36 = scmp.eq.s32.totalorder 0, 0
    // Predicated region
    $region18: #{tpu_custom_call.1} parent=1 // pred_check
      %p37 = pneg %p36
    $region19: #{tpu_custom_call.1} parent=1 // pred_check_branch
      %39 = sbr.rel (%p37) target = $region21
    $region20: #{tpu_custom_call.1} parent=1 // pred_region
      %vm40 = vcmask 64512
      %41 = vst.msk [vmem:[#allocation2] sm:$0xff] %vm40, 0.0
      %42 = vst.msk [vmem:[#allocation3] sm:$0xff] %vm40, 0.0
    $region21: #{tpu_custom_call.1} parent=1 // pred_fallthru
      _
    %v43 = vld [vmem:[#allocation4] sm:$0xff]
    %v44 = vld [vmem:[#allocation4 + $0x8] sm:$0xff]
    %v45 = vld [vmem:[#allocation4 + $0x10] sm:$0xff]
    %v46 = vld [vmem:[#allocation4 + $0x18] sm:$0xff]
    %v47 = vld [vmem:[#allocation4 + $0x20] sm:$0xff]
    %v48 = vld [vmem:[#allocation4 + $0x28] sm:$0xff]
    %v49 = vld [vmem:[#allocation4 + $0x30] sm:$0xff]
    %v50 = vld [vmem:[#allocation4 + $0x38] sm:$0xff]
    %v51 = vld [vmem:[#allocation2] sm:$0xff]
    %52 = vmatprep.subr.mxu0 0.0
    %53 = vmatpush1.xpose.msra.mxu0 0.0
    %54 = vmatprep.subr.mxu0 0.0
    %55 = vmatpush1.xpose.msra.mxu0 0.0
    %56 = vmatprep.subr.mxu0 0.0
    %57 = vmatpush1.xpose.msra.mxu0 0.0
    %58 = vmatprep.subr.mxu0 0.0
    %59 = vmatpush1.xpose.msra.mxu0 0.0
    %60 = vmatprep.subr.mxu0 0.0
    %61 = vmatpush1.xpose.msra.mxu0 0.0
    %62 = vmatprep.subr.mxu0 0.0
    %63 = vmatpush1.xpose.msra.mxu0 0.0
    %64 = vmatprep.subr.mxu0 0.0
    %65 = vmatpush1.xpose.msra.mxu0 0.0
    %66 = vmatprep.subr.mxu0 0.0
    %67 = vmatpush1.xpose.msra.mxu0 0.0
    %68 = vmatprep.subr.mxu0 0.0
    %69 = vmatpush1.xpose.msra.mxu0 0.0
    %70 = vmatprep.subr.mxu0 0.0
    %71 = vmatpush1.xpose.msra.mxu0 0.0
    %72 = vmatprep.subr.mxu0 0.0
    %73 = vmatpush1.xpose.msra.mxu0 0.0
    %74 = vmatprep.subr.mxu0 0.0
    %75 = vmatpush1.xpose.msra.mxu0 0.0
    %76 = vmatprep.subr.mxu0 0.0
    %77 = vmatpush1.xpose.msra.mxu0 0.0
    %78 = vmatprep.subr.mxu0 0.0
    %79 = vmatpush1.xpose.msra.mxu0 0.0
    %80 = vmatprep.subr.mxu0 0.0
    %81 = vmatpush1.xpose.msra.mxu0 0.0
    %82 = vmatprep.subr.mxu0 %v44
    %83 = vmatpush1.xpose.msra.mxu0 %v43
    %84 = vmatprep.subr.mxu0 0.0
    %85 = vmatpush2.xpose.msra.mxu0 0.0
    %86 = vmatprep.subr.mxu0 0.0
    %87 = vmatpush2.xpose.msra.mxu0 0.0
    %88 = vmatprep.subr.mxu0 0.0
    %89 = vmatpush2.xpose.msra.mxu0 0.0
    %90 = vmatprep.subr.mxu0 0.0
    %91 = vmatpush2.xpose.msra.mxu0 0.0
    %92 = vmatprep.subr.mxu0 0.0
    %93 = vmatpush2.xpose.msra.mxu0 0.0
    %94 = vmatprep.subr.mxu0 0.0
    %95 = vmatpush2.xpose.msra.mxu0 0.0
    %96 = vmatprep.subr.mxu0 0.0
    %97 = vmatpush2.xpose.msra.mxu0 0.0
    %98 = vmatprep.subr.mxu0 0.0
    %99 = vmatpush2.xpose.msra.mxu0 0.0
    %100 = vmatprep.subr.mxu0 0.0
    %101 = vmatpush2.xpose.msra.mxu0 0.0
    %102 = vmatprep.subr.mxu0 0.0
    %103 = vmatpush2.xpose.msra.mxu0 0.0
    %104 = vmatprep.subr.mxu0 0.0
    %105 = vmatpush2.xpose.msra.mxu0 0.0
    %106 = vmatprep.subr.mxu0 0.0
    %107 = vmatpush2.xpose.msra.mxu0 0.0
    %108 = vmatprep.subr.mxu0 0.0
    %109 = vmatpush2.xpose.msra.mxu0 0.0
    %110 = vmatprep.subr.mxu0 0.0
    %111 = vmatpush2.xpose.msra.mxu0 0.0
    %112 = vmatprep.subr.mxu0 0.0
    %113 = vmatpush2.xpose.msra.mxu0 0.0
    %114 = vmatprep.subr.mxu0 0.0
    %115 = vmatpush2.xpose.msra.mxu0 0.0
    %116 = vmatprep.mubr.f32.mxu0 %v44
    %117 = vmatmul.mubr.f32.gmra.mxu0 %v43
    %v118 = vpop.f32.mrf.mxu0
    %v119 = vadd.f32 0.0, %v118
    %v120 = vpop.f32.mrf.mxu0
    %121 = vdwg.mxu0
    %122 = vmatprep.subr.mxu0 0.0
    %123 = vmatpush1.xpose.msra.mxu0 0.0
    %124 = vmatprep.subr.mxu0 0.0
    %125 = vmatpush1.xpose.msra.mxu0 0.0
    %126 = vmatprep.subr.mxu0 0.0
    %127 = vmatpush1.xpose.msra.mxu0 0.0
    %128 = vmatprep.subr.mxu0 0.0
    %129 = vmatpush1.xpose.msra.mxu0 0.0
    %130 = vmatprep.subr.mxu0 0.0
    %131 = vmatpush1.xpose.msra.mxu0 0.0
    %132 = vmatprep.subr.mxu0 0.0
    %133 = vmatpush1.xpose.msra.mxu0 0.0
    %134 = vmatprep.subr.mxu0 0.0
    %135 = vmatpush1.xpose.msra.mxu0 0.0
    %136 = vmatprep.subr.mxu0 0.0
    %137 = vmatpush1.xpose.msra.mxu0 0.0
    %138 = vmatprep.subr.mxu0 0.0
    %139 = vmatpush1.xpose.msra.mxu0 0.0
    %140 = vmatprep.subr.mxu0 0.0
    %141 = vmatpush1.xpose.msra.mxu0 0.0
    %142 = vmatprep.subr.mxu0 0.0
    %143 = vmatpush1.xpose.msra.mxu0 0.0
    %144 = vmatprep.subr.mxu0 0.0
    %145 = vmatpush1.xpose.msra.mxu0 0.0
    %146 = vmatprep.subr.mxu0 0.0
    %147 = vmatpush1.xpose.msra.mxu0 0.0
    %148 = vmatprep.subr.mxu0 0.0
    %149 = vmatpush1.xpose.msra.mxu0 0.0
    %150 = vmatprep.subr.mxu0 0.0
    %151 = vmatpush1.xpose.msra.mxu0 0.0
    %152 = vmatprep.subr.mxu0 %v46
    %153 = vmatpush1.xpose.msra.mxu0 %v45
    %154 = vmatprep.subr.mxu0 0.0
    %155 = vmatpush2.xpose.msra.mxu0 0.0
    %156 = vmatprep.subr.mxu0 0.0
    %157 = vmatpush2.xpose.msra.mxu0 0.0
    %158 = vmatprep.subr.mxu0 0.0
    %159 = vmatpush2.xpose.msra.mxu0 0.0
    %160 = vmatprep.subr.mxu0 0.0
    %161 = vmatpush2.xpose.msra.mxu0 0.0
    %162 = vmatprep.subr.mxu0 0.0
    %163 = vmatpush2.xpose.msra.mxu0 0.0
    %164 = vmatprep.subr.mxu0 0.0
    %165 = vmatpush2.xpose.msra.mxu0 0.0
    %166 = vmatprep.subr.mxu0 0.0
    %167 = vmatpush2.xpose.msra.mxu0 0.0
    %168 = vmatprep.subr.mxu0 0.0
    %169 = vmatpush2.xpose.msra.mxu0 0.0
    %170 = vmatprep.subr.mxu0 0.0
    %171 = vmatpush2.xpose.msra.mxu0 0.0
    %172 = vmatprep.subr.mxu0 0.0
    %173 = vmatpush2.xpose.msra.mxu0 0.0
    %174 = vmatprep.subr.mxu0 0.0
    %175 = vmatpush2.xpose.msra.mxu0 0.0
    %176 = vmatprep.subr.mxu0 0.0
    %177 = vmatpush2.xpose.msra.mxu0 0.0
    %178 = vmatprep.subr.mxu0 0.0
    %179 = vmatpush2.xpose.msra.mxu0 0.0
    %180 = vmatprep.subr.mxu0 0.0
    %181 = vmatpush2.xpose.msra.mxu0 0.0
    %182 = vmatprep.subr.mxu0 0.0
    %183 = vmatpush2.xpose.msra.mxu0 0.0
    %184 = vmatprep.subr.mxu0 0.0
    %185 = vmatpush2.xpose.msra.mxu0 0.0
    %186 = vmatprep.mubr.f32.mxu0 %v46
    %187 = vmatmul.mubr.f32.gmra.mxu0 %v45
    %v188 = vpop.f32.mrf.mxu0
    %v189 = vadd.f32 %v119, %v188
    %v190 = vpop.f32.mrf.mxu0
    %191 = vdwg.mxu0
    %192 = vmatprep.subr.mxu0 0.0
    %193 = vmatpush1.xpose.msra.mxu0 0.0
    %194 = vmatprep.subr.mxu0 0.0
    %195 = vmatpush1.xpose.msra.mxu0 0.0
    %196 = vmatprep.subr.mxu0 0.0
    %197 = vmatpush1.xpose.msra.mxu0 0.0
    %198 = vmatprep.subr.mxu0 0.0
    %199 = vmatpush1.xpose.msra.mxu0 0.0
    %200 = vmatprep.subr.mxu0 0.0
    %201 = vmatpush1.xpose.msra.mxu0 0.0
    %202 = vmatprep.subr.mxu0 0.0
    %203 = vmatpush1.xpose.msra.mxu0 0.0
    %204 = vmatprep.subr.mxu0 0.0
    %205 = vmatpush1.xpose.msra.mxu0 0.0
    %206 = vmatprep.subr.mxu0 0.0
    %207 = vmatpush1.xpose.msra.mxu0 0.0
    %208 = vmatprep.subr.mxu0 0.0
    %209 = vmatpush1.xpose.msra.mxu0 0.0
    %210 = vmatprep.subr.mxu0 0.0
    %211 = vmatpush1.xpose.msra.mxu0 0.0
    %212 = vmatprep.subr.mxu0 0.0
    %213 = vmatpush1.xpose.msra.mxu0 0.0
    %214 = vmatprep.subr.mxu0 0.0
    %215 = vmatpush1.xpose.msra.mxu0 0.0
    %216 = vmatprep.subr.mxu0 0.0
    %217 = vmatpush1.xpose.msra.mxu0 0.0
    %218 = vmatprep.subr.mxu0 0.0
    %219 = vmatpush1.xpose.msra.mxu0 0.0
    %220 = vmatprep.subr.mxu0 0.0
    %221 = vmatpush1.xpose.msra.mxu0 0.0
    %222 = vmatprep.subr.mxu0 %v48
    %223 = vmatpush1.xpose.msra.mxu0 %v47
    %224 = vmatprep.subr.mxu0 0.0
    %225 = vmatpush2.xpose.msra.mxu0 0.0
    %226 = vmatprep.subr.mxu0 0.0
    %227 = vmatpush2.xpose.msra.mxu0 0.0
    %228 = vmatprep.subr.mxu0 0.0
    %229 = vmatpush2.xpose.msra.mxu0 0.0
    %230 = vmatprep.subr.mxu0 0.0
    %231 = vmatpush2.xpose.msra.mxu0 0.0
    %232 = vmatprep.subr.mxu0 0.0
    %233 = vmatpush2.xpose.msra.mxu0 0.0
    %234 = vmatprep.subr.mxu0 0.0
    %235 = vmatpush2.xpose.msra.mxu0 0.0
    %236 = vmatprep.subr.mxu0 0.0
    %237 = vmatpush2.xpose.msra.mxu0 0.0
    %238 = vmatprep.subr.mxu0 0.0
    %239 = vmatpush2.xpose.msra.mxu0 0.0
    %240 = vmatprep.subr.mxu0 0.0
    %241 = vmatpush2.xpose.msra.mxu0 0.0
    %242 = vmatprep.subr.mxu0 0.0
    %243 = vmatpush2.xpose.msra.mxu0 0.0
    %244 = vmatprep.subr.mxu0 0.0
    %245 = vmatpush2.xpose.msra.mxu0 0.0
    %246 = vmatprep.subr.mxu0 0.0
    %247 = vmatpush2.xpose.msra.mxu0 0.0
    %248 = vmatprep.subr.mxu0 0.0
    %249 = vmatpush2.xpose.msra.mxu0 0.0
    %250 = vmatprep.subr.mxu0 0.0
    %251 = vmatpush2.xpose.msra.mxu0 0.0
    %252 = vmatprep.subr.mxu0 0.0
    %253 = vmatpush2.xpose.msra.mxu0 0.0
    %254 = vmatprep.subr.mxu0 0.0
    %255 = vmatpush2.xpose.msra.mxu0 0.0
    %256 = vmatprep.mubr.f32.mxu0 %v48
    %257 = vmatmul.mubr.f32.gmra.mxu0 %v47
    %v258 = vpop.f32.mrf.mxu0
    %v259 = vadd.f32 %v189, %v258
    %v260 = vpop.f32.mrf.mxu0
    %261 = vdwg.mxu0
    %262 = vmatprep.subr.mxu0 0.0
    %263 = vmatpush1.xpose.msra.mxu0 0.0
    %264 = vmatprep.subr.mxu0 0.0
    %265 = vmatpush1.xpose.msra.mxu0 0.0
    %266 = vmatprep.subr.mxu0 0.0
    %267 = vmatpush1.xpose.msra.mxu0 0.0
    %268 = vmatprep.subr.mxu0 0.0
    %269 = vmatpush1.xpose.msra.mxu0 0.0
    %270 = vmatprep.subr.mxu0 0.0
    %271 = vmatpush1.xpose.msra.mxu0 0.0
    %272 = vmatprep.subr.mxu0 0.0
    %273 = vmatpush1.xpose.msra.mxu0 0.0
    %274 = vmatprep.subr.mxu0 0.0
    %275 = vmatpush1.xpose.msra.mxu0 0.0
    %276 = vmatprep.subr.mxu0 0.0
    %277 = vmatpush1.xpose.msra.mxu0 0.0
    %278 = vmatprep.subr.mxu0 0.0
    %279 = vmatpush1.xpose.msra.mxu0 0.0
    %280 = vmatprep.subr.mxu0 0.0
    %281 = vmatpush1.xpose.msra.mxu0 0.0
    %282 = vmatprep.subr.mxu0 0.0
    %283 = vmatpush1.xpose.msra.mxu0 0.0
    %284 = vmatprep.subr.mxu0 0.0
    %285 = vmatpush1.xpose.msra.mxu0 0.0
    %286 = vmatprep.subr.mxu0 0.0
    %287 = vmatpush1.xpose.msra.mxu0 0.0
    %288 = vmatprep.subr.mxu0 0.0
    %289 = vmatpush1.xpose.msra.mxu0 0.0
    %290 = vmatprep.subr.mxu0 0.0
    %291 = vmatpush1.xpose.msra.mxu0 0.0
    %292 = vmatprep.subr.mxu0 %v50
    %293 = vmatpush1.xpose.msra.mxu0 %v49
    %294 = vmatprep.subr.mxu0 0.0
    %295 = vmatpush2.xpose.msra.mxu0 0.0
    %296 = vmatprep.subr.mxu0 0.0
    %297 = vmatpush2.xpose.msra.mxu0 0.0
    %298 = vmatprep.subr.mxu0 0.0
    %299 = vmatpush2.xpose.msra.mxu0 0.0
    %300 = vmatprep.subr.mxu0 0.0
    %301 = vmatpush2.xpose.msra.mxu0 0.0
    %302 = vmatprep.subr.mxu0 0.0
    %303 = vmatpush2.xpose.msra.mxu0 0.0
    %304 = vmatprep.subr.mxu0 0.0
    %305 = vmatpush2.xpose.msra.mxu0 0.0
    %306 = vmatprep.subr.mxu0 0.0
    %307 = vmatpush2.xpose.msra.mxu0 0.0
    %308 = vmatprep.subr.mxu0 0.0
    %309 = vmatpush2.xpose.msra.mxu0 0.0
    %310 = vmatprep.subr.mxu0 0.0
    %311 = vmatpush2.xpose.msra.mxu0 0.0
    %312 = vmatprep.subr.mxu0 0.0
    %313 = vmatpush2.xpose.msra.mxu0 0.0
    %314 = vmatprep.subr.mxu0 0.0
    %315 = vmatpush2.xpose.msra.mxu0 0.0
    %316 = vmatprep.subr.mxu0 0.0
    %317 = vmatpush2.xpose.msra.mxu0 0.0
    %318 = vmatprep.subr.mxu0 0.0
    %319 = vmatpush2.xpose.msra.mxu0 0.0
    %320 = vmatprep.subr.mxu0 0.0
    %321 = vmatpush2.xpose.msra.mxu0 0.0
    %322 = vmatprep.subr.mxu0 0.0
    %323 = vmatpush2.xpose.msra.mxu0 0.0
    %324 = vmatprep.subr.mxu0 0.0
    %325 = vmatpush2.xpose.msra.mxu0 0.0
    %326 = vmatprep.mubr.f32.mxu0 %v50
    %327 = vmatmul.mubr.f32.gmra.mxu0 %v49
    %v328 = vpop.f32.mrf.mxu0
    %v329 = vadd.f32 %v259, %v328
    %v330 = vpop.f32.mrf.mxu0
    %331 = vdwg.mxu0
    %v332 = vadd.f32 %v51, %v329
    %vm333 = vcmask 64512
    %334 = vst.msk [vmem:[#allocation2] sm:$0xff] %vm333, %v332
    %v335 = vld [vmem:[#allocation7] sm:$0xff]
    %v336 = vld [vmem:[#allocation7 + $0x8] sm:$0xff]
    %v337 = vld [vmem:[#allocation7 + $0x10] sm:$0xff]
    %v338 = vld [vmem:[#allocation7 + $0x18] sm:$0xff]
    %v339 = vld [vmem:[#allocation7 + $0x20] sm:$0xff]
    %v340 = vld [vmem:[#allocation7 + $0x28] sm:$0xff]
    %v341 = vld [vmem:[#allocation7 + $0x30] sm:$0xff]
    %v342 = vld [vmem:[#allocation7 + $0x38] sm:$0xff]
    %v343 = vld [vmem:[#allocation3] sm:$0xff]
    %344 = vmatprep.subr.mxu0 0.0
    %345 = vmatpush1.xpose.msra.mxu0 0.0
    %346 = vmatprep.subr.mxu0 0.0
    %347 = vmatpush1.xpose.msra.mxu0 0.0
    %348 = vmatprep.subr.mxu0 0.0
    %349 = vmatpush1.xpose.msra.mxu0 0.0
    %350 = vmatprep.subr.mxu0 0.0
    %351 = vmatpush1.xpose.msra.mxu0 0.0
    %352 = vmatprep.subr.mxu0 0.0
    %353 = vmatpush1.xpose.msra.mxu0 0.0
    %354 = vmatprep.subr.mxu0 0.0
    %355 = vmatpush1.xpose.msra.mxu0 0.0
    %356 = vmatprep.subr.mxu0 0.0
    %357 = vmatpush1.xpose.msra.mxu0 0.0
    %358 = vmatprep.subr.mxu0 0.0
    %359 = vmatpush1.xpose.msra.mxu0 0.0
    %360 = vmatprep.subr.mxu0 0.0
    %361 = vmatpush1.xpose.msra.mxu0 0.0
    %362 = vmatprep.subr.mxu0 0.0
    %363 = vmatpush1.xpose.msra.mxu0 0.0
    %364 = vmatprep.subr.mxu0 0.0
    %365 = vmatpush1.xpose.msra.mxu0 0.0
    %366 = vmatprep.subr.mxu0 0.0
    %367 = vmatpush1.xpose.msra.mxu0 0.0
    %368 = vmatprep.subr.mxu0 0.0
    %369 = vmatpush1.xpose.msra.mxu0 0.0
    %370 = vmatprep.subr.mxu0 0.0
    %371 = vmatpush1.xpose.msra.mxu0 0.0
    %372 = vmatprep.subr.mxu0 0.0
    %373 = vmatpush1.xpose.msra.mxu0 0.0
    %374 = vmatprep.subr.mxu0 %v336
    %375 = vmatpush1.xpose.msra.mxu0 %v335
    %376 = vmatprep.subr.mxu0 0.0
    %377 = vmatpush2.xpose.msra.mxu0 0.0
    %378 = vmatprep.subr.mxu0 0.0
    %379 = vmatpush2.xpose.msra.mxu0 0.0
    %380 = vmatprep.subr.mxu0 0.0
    %381 = vmatpush2.xpose.msra.mxu0 0.0
    %382 = vmatprep.subr.mxu0 0.0
    %383 = vmatpush2.xpose.msra.mxu0 0.0
    %384 = vmatprep.subr.mxu0 0.0
    %385 = vmatpush2.xpose.msra.mxu0 0.0
    %386 = vmatprep.subr.mxu0 0.0
    %387 = vmatpush2.xpose.msra.mxu0 0.0
    %388 = vmatprep.subr.mxu0 0.0
    %389 = vmatpush2.xpose.msra.mxu0 0.0
    %390 = vmatprep.subr.mxu0 0.0
    %391 = vmatpush2.xpose.msra.mxu0 0.0
    %392 = vmatprep.subr.mxu0 0.0
    %393 = vmatpush2.xpose.msra.mxu0 0.0
    %394 = vmatprep.subr.mxu0 0.0
    %395 = vmatpush2.xpose.msra.mxu0 0.0
    %396 = vmatprep.subr.mxu0 0.0
    %397 = vmatpush2.xpose.msra.mxu0 0.0
    %398 = vmatprep.subr.mxu0 0.0
    %399 = vmatpush2.xpose.msra.mxu0 0.0
    %400 = vmatprep.subr.mxu0 0.0
    %401 = vmatpush2.xpose.msra.mxu0 0.0
    %402 = vmatprep.subr.mxu0 0.0
    %403 = vmatpush2.xpose.msra.mxu0 0.0
    %404 = vmatprep.subr.mxu0 0.0
    %405 = vmatpush2.xpose.msra.mxu0 0.0
    %406 = vmatprep.subr.mxu0 0.0
    %407 = vmatpush2.xpose.msra.mxu0 0.0
    %408 = vmatprep.mubr.f32.mxu0 %v336
    %409 = vmatmul.mubr.f32.gmra.mxu0 %v335
    %v410 = vpop.f32.mrf.mxu0
    %v411 = vadd.f32 0.0, %v410
    %v412 = vpop.f32.mrf.mxu0
    %413 = vdwg.mxu0
    %414 = vmatprep.subr.mxu0 0.0
    %415 = vmatpush1.xpose.msra.mxu0 0.0
    %416 = vmatprep.subr.mxu0 0.0
    %417 = vmatpush1.xpose.msra.mxu0 0.0
    %418 = vmatprep.subr.mxu0 0.0
    %419 = vmatpush1.xpose.msra.mxu0 0.0
    %420 = vmatprep.subr.mxu0 0.0
    %421 = vmatpush1.xpose.msra.mxu0 0.0
    %422 = vmatprep.subr.mxu0 0.0
    %423 = vmatpush1.xpose.msra.mxu0 0.0
    %424 = vmatprep.subr.mxu0 0.0
    %425 = vmatpush1.xpose.msra.mxu0 0.0
    %426 = vmatprep.subr.mxu0 0.0
    %427 = vmatpush1.xpose.msra.mxu0 0.0
    %428 = vmatprep.subr.mxu0 0.0
    %429 = vmatpush1.xpose.msra.mxu0 0.0
    %430 = vmatprep.subr.mxu0 0.0
    %431 = vmatpush1.xpose.msra.mxu0 0.0
    %432 = vmatprep.subr.mxu0 0.0
    %433 = vmatpush1.xpose.msra.mxu0 0.0
    %434 = vmatprep.subr.mxu0 0.0
    %435 = vmatpush1.xpose.msra.mxu0 0.0
    %436 = vmatprep.subr.mxu0 0.0
    %437 = vmatpush1.xpose.msra.mxu0 0.0
    %438 = vmatprep.subr.mxu0 0.0
    %439 = vmatpush1.xpose.msra.mxu0 0.0
    %440 = vmatprep.subr.mxu0 0.0
    %441 = vmatpush1.xpose.msra.mxu0 0.0
    %442 = vmatprep.subr.mxu0 0.0
    %443 = vmatpush1.xpose.msra.mxu0 0.0
    %444 = vmatprep.subr.mxu0 %v338
    %445 = vmatpush1.xpose.msra.mxu0 %v337
    %446 = vmatprep.subr.mxu0 0.0
    %447 = vmatpush2.xpose.msra.mxu0 0.0
    %448 = vmatprep.subr.mxu0 0.0
    %449 = vmatpush2.xpose.msra.mxu0 0.0
    %450 = vmatprep.subr.mxu0 0.0
    %451 = vmatpush2.xpose.msra.mxu0 0.0
    %452 = vmatprep.subr.mxu0 0.0
    %453 = vmatpush2.xpose.msra.mxu0 0.0
    %454 = vmatprep.subr.mxu0 0.0
    %455 = vmatpush2.xpose.msra.mxu0 0.0
    %456 = vmatprep.subr.mxu0 0.0
    %457 = vmatpush2.xpose.msra.mxu0 0.0
    %458 = vmatprep.subr.mxu0 0.0
    %459 = vmatpush2.xpose.msra.mxu0 0.0
    %460 = vmatprep.subr.mxu0 0.0
    %461 = vmatpush2.xpose.msra.mxu0 0.0
    %462 = vmatprep.subr.mxu0 0.0
    %463 = vmatpush2.xpose.msra.mxu0 0.0
    %464 = vmatprep.subr.mxu0 0.0
    %465 = vmatpush2.xpose.msra.mxu0 0.0
    %466 = vmatprep.subr.mxu0 0.0
    %467 = vmatpush2.xpose.msra.mxu0 0.0
    %468 = vmatprep.subr.mxu0 0.0
    %469 = vmatpush2.xpose.msra.mxu0 0.0
    %470 = vmatprep.subr.mxu0 0.0
    %471 = vmatpush2.xpose.msra.mxu0 0.0
    %472 = vmatprep.subr.mxu0 0.0
    %473 = vmatpush2.xpose.msra.mxu0 0.0
    %474 = vmatprep.subr.mxu0 0.0
    %475 = vmatpush2.xpose.msra.mxu0 0.0
    %476 = vmatprep.subr.mxu0 0.0
    %477 = vmatpush2.xpose.msra.mxu0 0.0
    %478 = vmatprep.mubr.f32.mxu0 %v338
    %479 = vmatmul.mubr.f32.gmra.mxu0 %v337
    %v480 = vpop.f32.mrf.mxu0
    %v481 = vadd.f32 %v411, %v480
    %v482 = vpop.f32.mrf.mxu0
    %483 = vdwg.mxu0
    %484 = vmatprep.subr.mxu0 0.0
    %485 = vmatpush1.xpose.msra.mxu0 0.0
    %486 = vmatprep.subr.mxu0 0.0
    %487 = vmatpush1.xpose.msra.mxu0 0.0
    %488 = vmatprep.subr.mxu0 0.0
    %489 = vmatpush1.xpose.msra.mxu0 0.0
    %490 = vmatprep.subr.mxu0 0.0
    %491 = vmatpush1.xpose.msra.mxu0 0.0
    %492 = vmatprep.subr.mxu0 0.0
    %493 = vmatpush1.xpose.msra.mxu0 0.0
    %494 = vmatprep.subr.mxu0 0.0
    %495 = vmatpush1.xpose.msra.mxu0 0.0
    %496 = vmatprep.subr.mxu0 0.0
    %497 = vmatpush1.xpose.msra.mxu0 0.0
    %498 = vmatprep.subr.mxu0 0.0
    %499 = vmatpush1.xpose.msra.mxu0 0.0
    %500 = vmatprep.subr.mxu0 0.0
    %501 = vmatpush1.xpose.msra.mxu0 0.0
    %502 = vmatprep.subr.mxu0 0.0
    %503 = vmatpush1.xpose.msra.mxu0 0.0
    %504 = vmatprep.subr.mxu0 0.0
    %505 = vmatpush1.xpose.msra.mxu0 0.0
    %506 = vmatprep.subr.mxu0 0.0
    %507 = vmatpush1.xpose.msra.mxu0 0.0
    %508 = vmatprep.subr.mxu0 0.0
    %509 = vmatpush1.xpose.msra.mxu0 0.0
    %510 = vmatprep.subr.mxu0 0.0
    %511 = vmatpush1.xpose.msra.mxu0 0.0
    %512 = vmatprep.subr.mxu0 0.0
    %513 = vmatpush1.xpose.msra.mxu0 0.0
    %514 = vmatprep.subr.mxu0 %v340
    %515 = vmatpush1.xpose.msra.mxu0 %v339
    %516 = vmatprep.subr.mxu0 0.0
    %517 = vmatpush2.xpose.msra.mxu0 0.0
    %518 = vmatprep.subr.mxu0 0.0
    %519 = vmatpush2.xpose.msra.mxu0 0.0
    %520 = vmatprep.subr.mxu0 0.0
    %521 = vmatpush2.xpose.msra.mxu0 0.0
    %522 = vmatprep.subr.mxu0 0.0
    %523 = vmatpush2.xpose.msra.mxu0 0.0
    %524 = vmatprep.subr.mxu0 0.0
    %525 = vmatpush2.xpose.msra.mxu0 0.0
    %526 = vmatprep.subr.mxu0 0.0
    %527 = vmatpush2.xpose.msra.mxu0 0.0
    %528 = vmatprep.subr.mxu0 0.0
    %529 = vmatpush2.xpose.msra.mxu0 0.0
    %530 = vmatprep.subr.mxu0 0.0
    %531 = vmatpush2.xpose.msra.mxu0 0.0
    %532 = vmatprep.subr.mxu0 0.0
    %533 = vmatpush2.xpose.msra.mxu0 0.0
    %534 = vmatprep.subr.mxu0 0.0
    %535 = vmatpush2.xpose.msra.mxu0 0.0
    %536 = vmatprep.subr.mxu0 0.0
    %537 = vmatpush2.xpose.msra.mxu0 0.0
    %538 = vmatprep.subr.mxu0 0.0
    %539 = vmatpush2.xpose.msra.mxu0 0.0
    %540 = vmatprep.subr.mxu0 0.0
    %541 = vmatpush2.xpose.msra.mxu0 0.0
    %542 = vmatprep.subr.mxu0 0.0
    %543 = vmatpush2.xpose.msra.mxu0 0.0
    %544 = vmatprep.subr.mxu0 0.0
    %545 = vmatpush2.xpose.msra.mxu0 0.0
    %546 = vmatprep.subr.mxu0 0.0
    %547 = vmatpush2.xpose.msra.mxu0 0.0
    %548 = vmatprep.mubr.f32.mxu0 %v340
    %549 = vmatmul.mubr.f32.gmra.mxu0 %v339
    %v550 = vpop.f32.mrf.mxu0
    %v551 = vadd.f32 %v481, %v550
    %v552 = vpop.f32.mrf.mxu0
    %553 = vdwg.mxu0
    %554 = vmatprep.subr.mxu0 0.0
    %555 = vmatpush1.xpose.msra.mxu0 0.0
    %556 = vmatprep.subr.mxu0 0.0
    %557 = vmatpush1.xpose.msra.mxu0 0.0
    %558 = vmatprep.subr.mxu0 0.0
    %559 = vmatpush1.xpose.msra.mxu0 0.0
    %560 = vmatprep.subr.mxu0 0.0
    %561 = vmatpush1.xpose.msra.mxu0 0.0
    %562 = vmatprep.subr.mxu0 0.0
    %563 = vmatpush1.xpose.msra.mxu0 0.0
    %564 = vmatprep.subr.mxu0 0.0
    %565 = vmatpush1.xpose.msra.mxu0 0.0
    %566 = vmatprep.subr.mxu0 0.0
    %567 = vmatpush1.xpose.msra.mxu0 0.0
    %568 = vmatprep.subr.mxu0 0.0
    %569 = vmatpush1.xpose.msra.mxu0 0.0
    %570 = vmatprep.subr.mxu0 0.0
    %571 = vmatpush1.xpose.msra.mxu0 0.0
    %572 = vmatprep.subr.mxu0 0.0
    %573 = vmatpush1.xpose.msra.mxu0 0.0
    %574 = vmatprep.subr.mxu0 0.0
    %575 = vmatpush1.xpose.msra.mxu0 0.0
    %576 = vmatprep.subr.mxu0 0.0
    %577 = vmatpush1.xpose.msra.mxu0 0.0
    %578 = vmatprep.subr.mxu0 0.0
    %579 = vmatpush1.xpose.msra.mxu0 0.0
    %580 = vmatprep.subr.mxu0 0.0
    %581 = vmatpush1.xpose.msra.mxu0 0.0
    %582 = vmatprep.subr.mxu0 0.0
    %583 = vmatpush1.xpose.msra.mxu0 0.0
    %584 = vmatprep.subr.mxu0 %v342
    %585 = vmatpush1.xpose.msra.mxu0 %v341
    %586 = vmatprep.subr.mxu0 0.0
    %587 = vmatpush2.xpose.msra.mxu0 0.0
    %588 = vmatprep.subr.mxu0 0.0
    %589 = vmatpush2.xpose.msra.mxu0 0.0
    %590 = vmatprep.subr.mxu0 0.0
    %591 = vmatpush2.xpose.msra.mxu0 0.0
    %592 = vmatprep.subr.mxu0 0.0
    %593 = vmatpush2.xpose.msra.mxu0 0.0
    %594 = vmatprep.subr.mxu0 0.0
    %595 = vmatpush2.xpose.msra.mxu0 0.0
    %596 = vmatprep.subr.mxu0 0.0
    %597 = vmatpush2.xpose.msra.mxu0 0.0
    %598 = vmatprep.subr.mxu0 0.0
    %599 = vmatpush2.xpose.msra.mxu0 0.0
    %600 = vmatprep.subr.mxu0 0.0
    %601 = vmatpush2.xpose.msra.mxu0 0.0
    %602 = vmatprep.subr.mxu0 0.0
    %603 = vmatpush2.xpose.msra.mxu0 0.0
    %604 = vmatprep.subr.mxu0 0.0
    %605 = vmatpush2.xpose.msra.mxu0 0.0
    %606 = vmatprep.subr.mxu0 0.0
    %607 = vmatpush2.xpose.msra.mxu0 0.0
    %608 = vmatprep.subr.mxu0 0.0
    %609 = vmatpush2.xpose.msra.mxu0 0.0
    %610 = vmatprep.subr.mxu0 0.0
    %611 = vmatpush2.xpose.msra.mxu0 0.0
    %612 = vmatprep.subr.mxu0 0.0
    %613 = vmatpush2.xpose.msra.mxu0 0.0
    %614 = vmatprep.subr.mxu0 0.0
    %615 = vmatpush2.xpose.msra.mxu0 0.0
    %616 = vmatprep.subr.mxu0 0.0
    %617 = vmatpush2.xpose.msra.mxu0 0.0
    %618 = vmatprep.mubr.f32.mxu0 %v342
    %619 = vmatmul.mubr.f32.gmra.mxu0 %v341
    %v620 = vpop.f32.mrf.mxu0
    %v621 = vadd.f32 %v551, %v620
    %v622 = vpop.f32.mrf.mxu0
    %623 = vdwg.mxu0
    %v624 = vadd.f32 %v343, %v621
    %625 = vst.msk [vmem:[#allocation3] sm:$0xff] %vm333, %v624
    // Predicated region
    $region22: #{tpu_custom_call.1} parent=1 // pred_check
      %p626 = pneg %p36
    $region23: #{tpu_custom_call.1} parent=1 // pred_check_branch
      %628 = sbr.rel (%p626) target = $region25
    $region24: #{tpu_custom_call.1} parent=1 // pred_region
      %v629 = vlaneseq
      %v630 = vshrl.u32 %v629, 7
      %v631 = vlaneseq
      %v632 = vand.u32 %v631, 127
      %vm633 = vcmp.eq.s32.totalorder %v630, %v632
      %v634 = vld [vmem:[#allocation2] sm:$0xff]
      %v635 = vsel %vm633, %v634, 0.0
      %v636 = vsel %vm333, %v635, 0.0
      %637 = vadd.xlane.f32.xlu0 %v636
      %v638 = vpop.xlane.xlu0 %637
      %v639 = vrot.slane %v636, 4
      %v640 = vadd.f32 %v636, %v639
      %v641 = vrot.slane %v640, 2
      %v642 = vadd.f32 %v640, %v641
      %v643 = vrot.slane %v642, 1
      %v644 = vadd.f32 %v642, %v643
      %v645 = vadd.f32 %v638, %v644
      %v646 = vmul.f32 %v634, 2.0
      %v647 = vsub.f32 %v645, %v646
      %v648 = vmax.f32 %v647, 0.0
      %v649 = vadd.f32 %v648, 1e-18
      %v650 = vrsqrt.pop %v649
      %v651 = vmul.f32 %v649, %v650
      %vm652 = vcmp.eq.f32.partialorder %v649, inf
      %v653 = vsel %vm652, %v649, %v651
      %vm654 = vcmp.eq.f32.partialorder %v649, 0.0
      %v655 = vand.u32 %v649, 2147483648
      %v656 = vsel %vm654, %v655, %v653
      %v657 = vsel %vm333, %v656, 0.0
      %v658 = vrot.slane %v657, 4
      %v659 = vadd.f32 %v657, %v658
      %v660 = vrot.slane %v659, 2
      %v661 = vadd.f32 %v659, %v660
      %v662 = vrot.slane %v661, 1
      %v663 = vadd.f32 %v661, %v662
      %v664 = vmul.f32 %v663, 0.16666667
      %665 = vadd.xlane.f32.xlu0 %v657
      %v666 = vpop.xlane.xlu0 %665
      %v667 = vrot.slane %v666, 4
      %v668 = vadd.f32 %v666, %v667
      %v669 = vrot.slane %v668, 2
      %v670 = vadd.f32 %v668, %v669
      %v671 = vrot.slane %v670, 1
      %v672 = vadd.f32 %v670, %v671
      %s673 = vtos %v672
      %s674 = smul.f32 %s673, 0.023809524
      %v675 = vsub.f32 %v656, %v664
      %v676 = vsub.f32 %v675, %v664
      %v677 = vstv %s674
      %v678 = vadd.f32 %v676, %v677
      %v679 = vsel %vm633, 0.0, %v678
      %680 = vst.msk [vmem:[#allocation2] sm:$0xff] %vm333, %v679
      %v681 = vld [vmem:[#allocation3] sm:$0xff]
      %v682 = vsel %vm633, %v681, 0.0
      %v683 = vsel %vm333, %v682, 0.0
      %684 = vadd.xlane.f32.xlu0 %v683
      %v685 = vpop.xlane.xlu0 %684
      %v686 = vrot.slane %v683, 4
      %v687 = vadd.f32 %v683, %v686
      %v688 = vrot.slane %v687, 2
      %v689 = vadd.f32 %v687, %v688
      %v690 = vrot.slane %v689, 1
      %v691 = vadd.f32 %v689, %v690
      %v692 = vadd.f32 %v685, %v691
      %v693 = vmul.f32 %v681, 2.0
      %v694 = vsub.f32 %v692, %v693
      %v695 = vmax.f32 %v694, 0.0
      %v696 = vadd.f32 %v695, 1e-18
      %v697 = vrsqrt.pop %v696
      %v698 = vmul.f32 %v696, %v697
      %vm699 = vcmp.eq.f32.partialorder %v696, inf
      %v700 = vsel %vm699, %v696, %v698
      %vm701 = vcmp.eq.f32.partialorder %v696, 0.0
      %v702 = vand.u32 %v696, 2147483648
      %v703 = vsel %vm701, %v702, %v700
      %v704 = vsel %vm333, %v703, 0.0
      %v705 = vrot.slane %v704, 4
      %v706 = vadd.f32 %v704, %v705
      %v707 = vrot.slane %v706, 2
      %v708 = vadd.f32 %v706, %v707
      %v709 = vrot.slane %v708, 1
      %v710 = vadd.f32 %v708, %v709
      %v711 = vmul.f32 %v710, 0.16666667
      %712 = vadd.xlane.f32.xlu0 %v704
      %v713 = vpop.xlane.xlu0 %712
      %v714 = vrot.slane %v713, 4
      %v715 = vadd.f32 %v713, %v714
      %v716 = vrot.slane %v715, 2
      %v717 = vadd.f32 %v715, %v716
      %v718 = vrot.slane %v717, 1
      %v719 = vadd.f32 %v717, %v718
      %s720 = vtos %v719
      %s721 = smul.f32 %s720, 0.023809524
      %v722 = vsub.f32 %v703, %v711
      %v723 = vsub.f32 %v722, %v711
      %v724 = vstv %s721
      %v725 = vadd.f32 %v723, %v724
      %v726 = vsel %vm633, 0.0, %v725
      %727 = vst.msk [vmem:[#allocation3] sm:$0xff] %vm333, %v726
      %v728 = vld [vmem:[#allocation2] sm:$0xff]
      %v729 = vld [vmem:[#allocation3] sm:$0xff]
      %v730 = vmul.f32 %v728, %v729
      %v731 = vsel %vm333, %v730, 0.0
      %732 = vadd.xlane.f32.xlu0 %v731
      %v733 = vpop.xlane.xlu0 %732
      %v734 = vrot.slane %v733, 4
      %v735 = vadd.f32 %v733, %v734
      %v736 = vrot.slane %v735, 2
      %v737 = vadd.f32 %v735, %v736
      %v738 = vrot.slane %v737, 1
      %v739 = vadd.f32 %v737, %v738
      %v740 = vmul.f32 %v739, 0.025
      %v741 = vmul.f32 %v728, %v728
      %v742 = vsel %vm333, %v741, 0.0
      %743 = vadd.xlane.f32.xlu0 %v742
      %v744 = vpop.xlane.xlu0 %743
      %v745 = vrot.slane %v744, 4
      %v746 = vadd.f32 %v744, %v745
      %v747 = vrot.slane %v746, 2
      %v748 = vadd.f32 %v746, %v747
      %v749 = vrot.slane %v748, 1
      %v750 = vadd.f32 %v748, %v749
      %v751 = vmul.f32 %v750, 0.025
      %v752 = vmul.f32 %v729, %v729
      %v753 = vsel %vm333, %v752, 0.0
      %754 = vadd.xlane.f32.xlu0 %v753
      %v755 = vpop.xlane.xlu0 %754
      %v756 = vrot.slane %v755, 4
      %v757 = vadd.f32 %v755, %v756
      %v758 = vrot.slane %v757, 2
      %v759 = vadd.f32 %v757, %v758
      %v760 = vrot.slane %v759, 1
      %v761 = vadd.f32 %v759, %v760
      %v762 = vmul.f32 %v761, 0.025
      %v763 = vmul.f32 %v751, %v762
      %v764 = vadd.f32 %v763, 1e-18
      %v765 = vrsqrt.pop %v764
      %v766 = vmul.f32 %v764, %v765
      %vm767 = vcmp.eq.f32.partialorder %v764, inf
      %v768 = vsel %vm767, %v764, %v766
      %vm769 = vcmp.eq.f32.partialorder %v764, 0.0
      %v770 = vand.u32 %v764, 2147483648
      %v771 = vsel %vm769, %v770, %v768
      %v772 = vrcp.pop %v771
      %v773 = vmul.f32 %v740, %v772
      %v774 = vsub.f32 0.0, %v773
      %vm775 = vcmask 0
      %776 = vst.msk [vmem:[#allocation9] sm:$0x1] %vm775, %v774
    $region25: #{tpu_custom_call.1} parent=1 // pred_fallthru
      _
    // Predicated region
    $region26: #{tpu_custom_call.1} parent=1 // pred_check
      _
    $region27: #{tpu_custom_call.1} parent=1 // pred_check_branch
      %778 = sbr.rel (0) target = $region29
    $region28: #{tpu_custom_call.1} parent=1 // pred_region
      %s780 = ssub.s32 16, 16
      %781 = vsyncadd [#allocation6], %s780
      %s783 = sshll.u32 [#allocation9], 4
      %s784 = int_to_ptr.vmem [resolvable:$true] %s783
      %786 = dma.vmem_to_hbm [thread:$0]  %s784, 16, %s2, [#allocation6]
    $region29: #{tpu_custom_call.1} parent=1 // pred_fallthru
      _
    // Predicated region
    $region30: #{tpu_custom_call.1} parent=1 // pred_check
      _
    $region31: #{tpu_custom_call.1} parent=1 // pred_check_branch
      %788 = sbr.rel (0) target = $region33
    $region32: #{tpu_custom_call.1} parent=1 // pred_region
      %789 = dma.done [#allocation6], 16
    $region33: #{tpu_custom_call.1} parent=1 // pred_fallthru
      _
    %790 = vsyncpa [#allocation5], 1
    %791 = vsyncpa [#allocation8], 1
    %792 = vsyncpa [#allocation6], 1

</llo_original>
